<compile_context>
chip_gen: v7x
topology: tpu7x:2x2x1
jax: 0.10.0
libtpu: 0.0.40
codegen_flags: <defaults>
</compile_context>

<pallas_src>
import jax
import jax.numpy as jnp
from jax.experimental import pallas as pl
from jax.experimental.pallas import tpu as pltpu

N_STATES = 4       # CartPole-style state vector
N_ACTIONS = 2
HIDDEN = 50

LANE = 128         # lane width used for the packed parameter slab
PARAM_ROWS = 152   # 8 (W1 region) + 8 (b1 row region) + 8 (b2 row region) + 128 (W2)

# Row offsets inside the packed parameter slab (all multiples of 8).
_W1_ROW = 0        # rows 0:4    -> W1 [4, 50]  (rows 4:8 stay zero)
_B1_ROW = 8        # row  8      -> b1 [1, 50]
_B2_ROW = 16       # row  16     -> b2 [1, 2]
_W2_ROW = 24       # rows 24:152 -> W2 [50, 2] inside a [128, 128] zero block

_MAX_BLOCK_ROWS = 512   # cap on the batch tile; tiny vs. any generation's VMEM


def _round_up(n, m):
    return ((n + m - 1) // m) * m


def pack_params(w1, b1, w2, b2):
    """Pack (w1[S,H], b1[1,H], w2[H,A], b2[1,A]) into one f32[152, 128] slab.

    Zero padding guarantees the unused hidden / output lanes contribute nothing
    through relu and the second matmul.
    """
    p = jnp.zeros((PARAM_ROWS, LANE), jnp.float32)
    p = p.at[_W1_ROW:_W1_ROW + N_STATES, 0:HIDDEN].set(w1.astype(jnp.float32))
    p = p.at[_B1_ROW, 0:HIDDEN].set(b1.reshape(-1).astype(jnp.float32))
    p = p.at[_B2_ROW, 0:N_ACTIONS].set(b2.reshape(-1).astype(jnp.float32))
    p = p.at[_W2_ROW:_W2_ROW + HIDDEN, 0:N_ACTIONS].set(w2.astype(jnp.float32))
    return p


def net_kernel(x_ref, p_ref, o_ref):
    # Static slices of the packed parameter slab (cheap in-VMEM loads).
    w1 = p_ref[_W1_ROW:_W1_ROW + N_STATES, :]     # [4, 128]
    b1 = p_ref[_B1_ROW:_B1_ROW + 1, :]            # [1, 128]
    b2 = p_ref[_B2_ROW:_B2_ROW + 1, :]            # [1, 128]
    w2 = p_ref[_W2_ROW:_W2_ROW + LANE, :]         # [128, 128]

    # fc1: [TB, 4] @ [4, 128] + [1, 128] -> relu   (lanes 50:128 stay zero)
    h = jnp.dot(x_ref[...], w1, preferred_element_type=jnp.float32) + b1
    h = jnp.maximum(h, 0.0)

    # out: [TB, 128] @ [128, 128] + [1, 128]; only the first N_ACTIONS lanes
    # are meaningful — store the output at its true width.
    q = jnp.dot(h, w2, preferred_element_type=jnp.float32) + b2
    o_ref[...] = q[:, :N_ACTIONS].astype(o_ref.dtype)


def _choose_block_rows(batch):
    """Bucketed (power-of-two, >=8, <=512) batch tile.

    Buckets keep the Mosaic compile stable across the small fixed set of batch
    sizes a DQN loop uses (1 for acting, a fixed replay batch for learning).
    """
    return int(min(_MAX_BLOCK_ROWS, max(8, pl.next_power_of_2(int(batch)))))


def net_forward(x, params_packed, *, block_rows=None):
    """x: [B, N_STATES]; params_packed: f32[152, 128] from pack_params.

    Returns [B, N_ACTIONS] f32.

    On v7x (2 TensorCores), pass block_rows = round_up(cdiv(B, 2), 8) (static
    per deployment) so the 'parallel' grid axis puts one balanced tile on each
    core.  On v5e/v6e the default (one big tile -> fewest grid steps) is best.
    """
    if x.dtype != jnp.float32:
        x = x.astype(jnp.float32)
    B = x.shape[0]
    if block_rows is None:
        block_rows = _choose_block_rows(B)

    grid = (pl.cdiv(B, block_rows),)
    return pl.pallas_call(
        net_kernel,
        out_shape=jax.ShapeDtypeStruct((B, N_ACTIONS), jnp.float32),
        grid=grid,
        in_specs=[
            # x tile per grid step; lane dim 4 == full array dim (legal).
            pl.BlockSpec((block_rows, N_STATES), lambda i: (i, 0)),
            # packed params: constant index_map -> resident across steps.
            pl.BlockSpec((PARAM_ROWS, LANE), lambda i: (0, 0)),
        ],
        # true-width output block; ragged final block rows are write-masked.
        out_specs=pl.BlockSpec((block_rows, N_ACTIONS), lambda i: (i, 0)),
        compiler_params=pltpu.CompilerParams(
            dimension_semantics=("parallel",),       # shards steps over v7x's 2 TCs
            vmem_limit_bytes=32 * 1024 * 1024,       # explicit, v7x(64 MiB)-safe
        ),
    )(x, params_packed)


def init_params(key):
    k1, k2, k3, k4 = jax.random.split(key, 4)
    # Matches nn.Linear(N_States, 50) with weight.data.normal_(0, 0.1);
    # biases use PyTorch's default uniform(-1/sqrt(fan_in), 1/sqrt(fan_in)).
    w1 = (0.1 * jax.random.normal(k1, (HIDDEN, N_STATES), jnp.float32)).T  # [S, H]
    b1 = jax.random.uniform(
        k2, (1, HIDDEN), jnp.float32,
        minval=-1.0 / jnp.sqrt(N_STATES), maxval=1.0 / jnp.sqrt(N_STATES))
    w2 = (0.1 * jax.random.normal(k3, (N_ACTIONS, HIDDEN), jnp.float32)).T  # [H, A]
    b2 = jax.random.uniform(
        k4, (1, N_ACTIONS), jnp.float32,
        minval=-1.0 / jnp.sqrt(HIDDEN), maxval=1.0 / jnp.sqrt(HIDDEN))
    return w1, b1, w2, b2


def _reference(x, w1, b1, w2, b2):
    return jnp.maximum(x @ w1 + b1, 0.0) @ w2 + b2


if __name__ == "__main__":
    key = jax.random.PRNGKey(0)
    pkey, xkey1, xkey2 = jax.random.split(key, 3)
    w1, b1, w2, b2 = init_params(pkey)
    # NOTE: in a training loop params_packed must be rebuilt after every
    # optimizer step, or the kernel evaluates stale weights.
    params_packed = pack_params(w1, b1, w2, b2)

    # Small per-step batch (single grid step, block_rows bucket = 8).
    batch = 8
    x = jax.random.normal(xkey1, (batch, N_STATES), jnp.float32)
    out = jax.block_until_ready(net_forward(x, params_packed))
    ref = _reference(x, w1, b1, w2, b2)
    assert out.shape == (batch, N_ACTIONS)
    assert jnp.allclose(out, ref, atol=1e-5, rtol=1e-5)

    # Replay-buffer-sized batch: multi-step grid + masked ragged final block.
    big_batch = 1200
    xb = jax.random.normal(xkey2, (big_batch, N_STATES), jnp.float32)
    out_b = jax.block_until_ready(net_forward(xb, params_packed))
    ref_b = _reference(xb, w1, b1, w2, b2)
    assert out_b.shape == (big_batch, N_ACTIONS)
    assert jnp.allclose(out_b, ref_b, atol=1e-5, rtol=1e-5)

    # v7x-style override: two balanced 'parallel' steps (608 + 592 rows).
    tb_v7x = _round_up(-(-big_batch // 2), 8)
    out_v7x = jax.block_until_ready(
        net_forward(xb, params_packed, block_rows=tb_v7x))
    assert jnp.allclose(out_v7x, ref_b, atol=1e-5, rtol=1e-5)

    print("KERNEL_OK")
</pallas_src>

<mosaic_0001>
module attributes {stable_mosaic.version = 11 : i64} {
  func.func @net_kernel(%arg0: i32, %arg1: memref<8x4xf32, #tpu.memory_space<vmem>>, %arg2: memref<152x128xf32, #tpu.memory_space<vmem>>, %arg3: memref<8x2xf32, #tpu.memory_space<vmem>>) attributes {dimension_semantics = [#tpu.dimension_semantics<parallel>], iteration_bounds = array<i64: 1>, scalar_prefetch = 0 : i64, scratch_operands = 0 : i64, tpu.core_type = #tpu.core_type<tc>, window_params = [{transform_indices = @transform_0, window_bounds = array<i64: 8, 4>}, {pipeline_mode = #tpu.pipeline_mode<synchronous>, transform_indices = @transform_1, window_bounds = array<i64: 152, 128>}, {transform_indices = @transform_2, window_bounds = array<i64: 8, 2>}]} {
    %c0 = arith.constant 0 : index
    %c0_0 = arith.constant 0 : index
    %0 = vector.load %arg2[%c0, %c0_0] : memref<152x128xf32, #tpu.memory_space<vmem>>, vector<4x128xf32>
    %c8 = arith.constant 8 : index
    %c0_1 = arith.constant 0 : index
    %1 = vector.load %arg2[%c8, %c0_1] : memref<152x128xf32, #tpu.memory_space<vmem>>, vector<1x128xf32>
    %c16 = arith.constant 16 : index
    %c0_2 = arith.constant 0 : index
    %2 = vector.load %arg2[%c16, %c0_2] : memref<152x128xf32, #tpu.memory_space<vmem>>, vector<1x128xf32>
    %c24 = arith.constant 24 : index
    %c0_3 = arith.constant 0 : index
    %3 = vector.load %arg2[%c24, %c0_3] : memref<152x128xf32, #tpu.memory_space<vmem>>, vector<128x128xf32>
    %c0_4 = arith.constant 0 : index
    %c0_5 = arith.constant 0 : index
    %4 = vector.load %arg1[%c0_4, %c0_5] : memref<8x4xf32, #tpu.memory_space<vmem>>, vector<8x4xf32>
    %cst = arith.constant dense<0.000000e+00> : vector<8x128xf32>
    %5 = tpu.matmul %4, %0, %cst {dimension_numbers = #tpu.dot_dimension_numbers<[1], [0], [0], [1], [0, 0, 1, 1], [], []>} : vector<8x4xf32>, vector<4x128xf32>, vector<8x128xf32> -> vector<8x128xf32>
    %6 = vector.broadcast %1 : vector<1x128xf32> to vector<8x128xf32>
    %7 = arith.addf %5, %6 : vector<8x128xf32>
    %cst_6 = arith.constant 0.000000e+00 : f32
    %8 = vector.broadcast %cst_6 : f32 to vector<8x128xf32>
    %9 = arith.maximumf %7, %8 : vector<8x128xf32>
    %cst_7 = arith.constant dense<0.000000e+00> : vector<8x128xf32>
    %10 = tpu.matmul %9, %3, %cst_7 {dimension_numbers = #tpu.dot_dimension_numbers<[1], [0], [0], [1], [0, 0, 1, 1], [], []>} : vector<8x128xf32>, vector<128x128xf32>, vector<8x128xf32> -> vector<8x128xf32>
    %11 = vector.broadcast %2 : vector<1x128xf32> to vector<8x128xf32>
    %12 = arith.addf %10, %11 : vector<8x128xf32>
    %13 = vector.extract_strided_slice %12 {offsets = [0, 0], sizes = [8, 2], strides = [1, 1]} : vector<8x128xf32> to vector<8x2xf32>
    %c0_8 = arith.constant 0 : index
    %c0_9 = arith.constant 0 : index
    %14 = vector.load %arg3[%c0_8, %c0_9] : memref<8x2xf32, #tpu.memory_space<vmem>>, vector<8x2xf32>
    tpu.vector_store %arg3[%c0_8, %c0_9], %13 {strides = array<i32>} : memref<8x2xf32, #tpu.memory_space<vmem>>, vector<8x2xf32>,
    return
  }
  func.func @transform_0(%arg0: i32) -> (i32, i32) {
    %c0_i32 = arith.constant 0 : i32
    %c0_i32_0 = arith.constant 0 : i32
    return %arg0, %c0_i32 : i32, i32
  }
  func.func @transform_1(%arg0: i32) -> (i32, i32) {
    %c0_i32 = arith.constant 0 : i32
    %c0_i32_0 = arith.constant 0 : i32
    %c0_i32_1 = arith.constant 0 : i32
    return %c0_i32, %c0_i32_0 : i32, i32
  }
  func.func @transform_2(%arg0: i32) -> (i32, i32) {
    %c0_i32 = arith.constant 0 : i32
    %c0_i32_0 = arith.constant 0 : i32
    return %arg0, %c0_i32 : i32, i32
  }
}

</mosaic_0001>

<llo_original>
// kernel: tpu_custom_call.1
$region0: #{tpu_custom_call.1}
  #allocation0 [shape = 'u32[]', space=smem, size = 0x4, offset = 0x4, fixed_abs, tag = 'smem constant byte address 0x4 - core index']
  #allocation1 [shape = 'u32[144,128]{1,0:T(1,128)}', space=vmem, size = 0x12000, scoped, tag = 'internal scratch']
  %s0 = inlined_call_operand.vmem [shape: f32[8,4], index: 0, kind: input, shape index: {}]
  %s1 = inlined_call_operand.hbm [shape: f32[152,128], index: 1, kind: input, shape index: {}]
  %s2 = inlined_call_operand.vmem [shape: f32[8,2], index: 2, kind: output, shape index: {}]
  %s3 = sld [smem:[#allocation0]]
  $region22: #{tpu_custom_call.1} parent=0
    _
  %s5 = ssub.s32 1, %s3
  %s6 = scalar_select 0, %s5, %s3
  $region1: #{tpu_custom_call.1} parent=0
    #allocation2 [shape = 'u8[77824]{0}', space=vmem, size = 0x13000, scoped, tag = 'input window, operand 1, single buffered']
    #allocation3 [shape = 's32[1]{0}', space=sflag, size = 0x4, scoped, tag = 'scoped memory for tpu_custom_call.1']
    %7 = vsyncpa [#allocation3], 0
    // Predicated region
    $region2: #{tpu_custom_call.1} parent=1 // pred_check
      _
    $region3: #{tpu_custom_call.1} parent=1 // pred_check_branch
      %9 = sbr.rel (0) target = $region5
    $region4: #{tpu_custom_call.1} parent=1 // pred_region
      _
    $region5: #{tpu_custom_call.1} parent=1 // pred_fallthru
      _
    // Predicated region
    $region6: #{tpu_custom_call.1} parent=1 // pred_check
      _
    $region7: #{tpu_custom_call.1} parent=1 // pred_check_branch
      %11 = sbr.rel (0) target = $region9
    $region8: #{tpu_custom_call.1} parent=1 // pred_region
      %s13 = ssub.s32 2432, 2432
      %14 = vsyncadd [#allocation3], %s13
      %s15 = sshll.u32 [#allocation2], 4
      %s16 = int_to_ptr.vmem [resolvable:$true] %s15
      %21 = dma.hbm_to_vmem [thread:$0]  %s1, 2432, %s16, [#allocation3], 128, 128, 8
    $region9: #{tpu_custom_call.1} parent=1 // pred_fallthru
      _
    // Predicated region
    $region10: #{tpu_custom_call.1} parent=1 // pred_check
      _
    $region11: #{tpu_custom_call.1} parent=1 // pred_check_branch
      %23 = sbr.rel (0) target = $region13
    $region12: #{tpu_custom_call.1} parent=1 // pred_region
      %24 = dma.done [#allocation3], 2432
    $region13: #{tpu_custom_call.1} parent=1 // pred_fallthru
      _
    %v25 = vld [vmem:[#allocation2] sm:$0xf]
    %v26 = vld [vmem:[#allocation2 + $0x8] sm:$0x1]
    %v27 = vld [vmem:[#allocation2 + $0x10] sm:$0x1]
    %v28 = vld [vmem:[#allocation2 + $0x18] sm:$0xff]
    %v29 = vld [vmem:[#allocation2 + $0x20] sm:$0xff]
    %v30 = vld [vmem:[#allocation2 + $0x28] sm:$0xff]
    %v31 = vld [vmem:[#allocation2 + $0x30] sm:$0xff]
    %v32 = vld [vmem:[#allocation2 + $0x38] sm:$0xff]
    %v33 = vld [vmem:[#allocation2 + $0x40] sm:$0xff]
    %v34 = vld [vmem:[#allocation2 + $0x48] sm:$0xff]
    %v35 = vld [vmem:[#allocation2 + $0x50] sm:$0xff]
    %v36 = vld [vmem:[#allocation2 + $0x58] sm:$0xff]
    %v37 = vld [vmem:[#allocation2 + $0x60] sm:$0xff]
    %v38 = vld [vmem:[#allocation2 + $0x68] sm:$0xff]
    %v39 = vld [vmem:[#allocation2 + $0x70] sm:$0xff]
    %v40 = vld [vmem:[#allocation2 + $0x78] sm:$0xff]
    %v41 = vld [vmem:[#allocation2 + $0x80] sm:$0xff]
    %v42 = vld [vmem:[#allocation2 + $0x88] sm:$0xff]
    %v43 = vld [vmem:[#allocation2 + $0x90] sm:$0xff]
    %v44 = vld [vmem:[%s0] sm:$0xff]
    %v45 = vlaneseq
    %v46 = vshrl.u32 %v45, 7
    %v47 = vsub.s32 0, %v46
    %v48 = vrot.slane %v26, %v47
    %vm49 = vcmask 31744
    %v51 = vsel %vm49, %v44, 0
    %vm53 = vcmask 1043456
    %v55 = vsel %vm53, %v25, 0
    %57 = vmatprep.subr.mxu0 0.0
    %58 = vmatpush1.msra.mxu0 %v55
    %59 = vmatprep.subr.mxu0 0.0
    %60 = vmatpush1.msra.mxu0 0.0
    %61 = vmatprep.subr.mxu0 0.0
    %62 = vmatpush1.msra.mxu0 0.0
    %63 = vmatprep.subr.mxu0 0.0
    %64 = vmatpush1.msra.mxu0 0.0
    %65 = vmatprep.subr.mxu0 0.0
    %66 = vmatpush1.msra.mxu0 0.0
    %67 = vmatprep.subr.mxu0 0.0
    %68 = vmatpush1.msra.mxu0 0.0
    %69 = vmatprep.subr.mxu0 0.0
    %70 = vmatpush1.msra.mxu0 0.0
    %71 = vmatprep.subr.mxu0 0.0
    %72 = vmatpush1.msra.mxu0 0.0
    %73 = vmatprep.subr.mxu0 0.0
    %74 = vmatpush1.msra.mxu0 0.0
    %75 = vmatprep.subr.mxu0 0.0
    %76 = vmatpush1.msra.mxu0 0.0
    %77 = vmatprep.subr.mxu0 0.0
    %78 = vmatpush1.msra.mxu0 0.0
    %79 = vmatprep.subr.mxu0 0.0
    %80 = vmatpush1.msra.mxu0 0.0
    %81 = vmatprep.subr.mxu0 0.0
    %82 = vmatpush1.msra.mxu0 0.0
    %83 = vmatprep.subr.mxu0 0.0
    %84 = vmatpush1.msra.mxu0 0.0
    %85 = vmatprep.subr.mxu0 0.0
    %86 = vmatpush1.msra.mxu0 0.0
    %87 = vmatprep.subr.mxu0 0.0
    %88 = vmatpush1.msra.mxu0 0.0
    %89 = vmatprep.subr.mxu0 0.0
    %90 = vmatpush1.msra.mxu0 0.0
    %91 = vmatprep.subr.mxu0 0.0
    %92 = vmatpush1.msra.mxu0 0.0
    %93 = vmatprep.subr.mxu0 0.0
    %94 = vmatpush1.msra.mxu0 0.0
    %95 = vmatprep.subr.mxu0 0.0
    %96 = vmatpush1.msra.mxu0 0.0
    %97 = vmatprep.subr.mxu0 0.0
    %98 = vmatpush1.msra.mxu0 0.0
    %99 = vmatprep.subr.mxu0 0.0
    %100 = vmatpush1.msra.mxu0 0.0
    %101 = vmatprep.subr.mxu0 0.0
    %102 = vmatpush1.msra.mxu0 0.0
    %103 = vmatprep.subr.mxu0 0.0
    %104 = vmatpush1.msra.mxu0 0.0
    %105 = vmatprep.subr.mxu0 0.0
    %106 = vmatpush1.msra.mxu0 0.0
    %107 = vmatprep.subr.mxu0 0.0
    %108 = vmatpush1.msra.mxu0 0.0
    %109 = vmatprep.subr.mxu0 0.0
    %110 = vmatpush1.msra.mxu0 0.0
    %111 = vmatprep.subr.mxu0 0.0
    %112 = vmatpush1.msra.mxu0 0.0
    %113 = vmatprep.subr.mxu0 0.0
    %114 = vmatpush1.msra.mxu0 0.0
    %115 = vmatprep.subr.mxu0 0.0
    %116 = vmatpush1.msra.mxu0 0.0
    %117 = vmatprep.subr.mxu0 0.0
    %118 = vmatpush1.msra.mxu0 0.0
    %119 = vmatprep.subr.mxu0 0.0
    %120 = vmatpush1.msra.mxu0 0.0
    %121 = vmatprep.mubr.f32.mxu0 0.0
    %122 = vmatmul.mubr.f32.gmra.mrb[0].mxu0 %v51
    %v123 = vpop.f32.mrb[0].mxu0
    %v124 = vadd.f32 %v48, %v123
    %v125 = vpop.f32.mrb[0].mxu0
    %126 = vdwg.mxu0
    %v127 = vmax.f32 %v124, 0.0
    %v128 = vlaneseq
    %v129 = vshrl.u32 %v128, 7
    %v130 = vsub.s32 0, %v129
    %v131 = vrot.slane %v27, %v130
    %132 = vmatprep.subr.mxu0 0.0
    %133 = vmatpush1.msra.mxu0 %v28
    %134 = vmatprep.subr.mxu0 0.0
    %135 = vmatpush1.msra.mxu0 %v29
    %136 = vmatprep.subr.mxu0 0.0
    %137 = vmatpush1.msra.mxu0 %v30
    %138 = vmatprep.subr.mxu0 0.0
    %139 = vmatpush1.msra.mxu0 %v31
    %140 = vmatprep.subr.mxu0 0.0
    %141 = vmatpush1.msra.mxu0 %v32
    %142 = vmatprep.subr.mxu0 0.0
    %143 = vmatpush1.msra.mxu0 %v33
    %144 = vmatprep.subr.mxu0 0.0
    %145 = vmatpush1.msra.mxu0 %v34
    %146 = vmatprep.subr.mxu0 0.0
    %147 = vmatpush1.msra.mxu0 %v35
    %148 = vmatprep.subr.mxu0 0.0
    %149 = vmatpush1.msra.mxu0 %v36
    %150 = vmatprep.subr.mxu0 0.0
    %151 = vmatpush1.msra.mxu0 %v37
    %152 = vmatprep.subr.mxu0 0.0
    %153 = vmatpush1.msra.mxu0 %v38
    %154 = vmatprep.subr.mxu0 0.0
    %155 = vmatpush1.msra.mxu0 %v39
    %156 = vmatprep.subr.mxu0 0.0
    %157 = vmatpush1.msra.mxu0 %v40
    %158 = vmatprep.subr.mxu0 0.0
    %159 = vmatpush1.msra.mxu0 %v41
    %160 = vmatprep.subr.mxu0 0.0
    %161 = vmatpush1.msra.mxu0 %v42
    %162 = vmatprep.subr.mxu0 0.0
    %163 = vmatpush1.msra.mxu0 %v43
    %164 = vmatprep.subr.mxu0 0.0
    %165 = vmatpush1.msra.mxu0 0.0
    %166 = vmatprep.subr.mxu0 0.0
    %167 = vmatpush1.msra.mxu0 0.0
    %168 = vmatprep.subr.mxu0 0.0
    %169 = vmatpush1.msra.mxu0 0.0
    %170 = vmatprep.subr.mxu0 0.0
    %171 = vmatpush1.msra.mxu0 0.0
    %172 = vmatprep.subr.mxu0 0.0
    %173 = vmatpush1.msra.mxu0 0.0
    %174 = vmatprep.subr.mxu0 0.0
    %175 = vmatpush1.msra.mxu0 0.0
    %176 = vmatprep.subr.mxu0 0.0
    %177 = vmatpush1.msra.mxu0 0.0
    %178 = vmatprep.subr.mxu0 0.0
    %179 = vmatpush1.msra.mxu0 0.0
    %180 = vmatprep.subr.mxu0 0.0
    %181 = vmatpush1.msra.mxu0 0.0
    %182 = vmatprep.subr.mxu0 0.0
    %183 = vmatpush1.msra.mxu0 0.0
    %184 = vmatprep.subr.mxu0 0.0
    %185 = vmatpush1.msra.mxu0 0.0
    %186 = vmatprep.subr.mxu0 0.0
    %187 = vmatpush1.msra.mxu0 0.0
    %188 = vmatprep.subr.mxu0 0.0
    %189 = vmatpush1.msra.mxu0 0.0
    %190 = vmatprep.subr.mxu0 0.0
    %191 = vmatpush1.msra.mxu0 0.0
    %192 = vmatprep.subr.mxu0 0.0
    %193 = vmatpush1.msra.mxu0 0.0
    %194 = vmatprep.subr.mxu0 0.0
    %195 = vmatpush1.msra.mxu0 0.0
    %196 = vmatprep.mubr.f32.mxu0 0.0
    %197 = vmatmul.mubr.f32.gmra.mrb[0].mxu0 %v127
    %v198 = vpop.f32.mrb[0].mxu0
    %v199 = vadd.f32 %v131, %v198
    %v200 = vpop.f32.mrb[0].mxu0
    %201 = vdwg.mxu0
    %vm202 = vcmask 15360
    %203 = vst.msk [vmem:[%s2] sm:$0xff] %vm202, %v199
    // Predicated region
    $region14: #{tpu_custom_call.1} parent=1 // pred_check
      _
    $region15: #{tpu_custom_call.1} parent=1 // pred_check_branch
      %205 = sbr.rel (0) target = $region17
    $region16: #{tpu_custom_call.1} parent=1 // pred_region
      _
    $region17: #{tpu_custom_call.1} parent=1 // pred_fallthru
      _
    // Predicated region
    $region18: #{tpu_custom_call.1} parent=1 // pred_check
      _
    $region19: #{tpu_custom_call.1} parent=1 // pred_check_branch
      %207 = sbr.rel (0) target = $region21
    $region20: #{tpu_custom_call.1} parent=1 // pred_region
      _
    $region21: #{tpu_custom_call.1} parent=1 // pred_fallthru
      _
    %208 = vsyncpa [#allocation3], 1

</llo_original>
